<compile_context>
chip_gen: v6e
topology: v6e:2x2x1
jax: 0.10.0
libtpu: 0.0.40
codegen_flags: <defaults>
</compile_context>

<pallas_src>
import functools

import jax
import jax.numpy as jnp
from jax.experimental import pallas as pl
from jax.experimental.pallas import tpu as pltpu


def _ce_label_smooth_kernel(logits_ref, targets_ref, out_ref, *,
                            epsilon, num_classes, batch):
    # logits_ref:  (TILE_B, K) block in VMEM (any float dtype; cast to f32)
    # targets_ref: (TILE_B, 1) int32 block in VMEM
    # out_ref:     (TILE_B, 1) f32 per-row loss (padded rows written as 0)
    i = pl.program_id(0)
    x = logits_ref[...].astype(jnp.float32)                    # (tb, K)
    t = targets_ref[...]                                       # (tb, 1) int32
    tb, k = x.shape

    # Stable log-softmax pieces along the class (lane) axis.
    m = jnp.max(x, axis=1, keepdims=True)                      # (tb, 1)
    z = x - m                                                  # (tb, K), <= 0
    lse = jnp.log(jnp.sum(jnp.exp(z), axis=1, keepdims=True))  # (tb, 1)

    # Fused loss: lse - (1-eps)*z[target] - (eps/K)*sum_j z[j]
    class_idx = jax.lax.broadcasted_iota(jnp.int32, (tb, k), 1)
    z_t = jnp.sum(jnp.where(class_idx == t, z, 0.0), axis=1, keepdims=True)
    z_sum = jnp.sum(z, axis=1, keepdims=True)
    row_loss = lse - (1.0 - epsilon) * z_t - (epsilon / num_classes) * z_sum

    # Mask rows of a partial last tile (garbage padded rows must not contribute).
    row_idx = jax.lax.broadcasted_iota(jnp.int32, (tb, 1), 0) + i * tb
    valid = row_idx < batch
    out_ref[...] = jnp.where(valid, row_loss, 0.0)


def cross_entropy_label_smooth(logits, targets, *, num_classes, epsilon=0.1,
                               tile_b=256):
    """logits: (B, num_classes) float; targets: (B,) int class ids -> scalar loss."""
    B, K = logits.shape
    assert K == num_classes
    itemsize = jnp.dtype(logits.dtype).itemsize

    # Auto-shrink the batch tile if K is large so that the double-buffered
    # working set stays well under VMEM on every chip generation.
    vmem_budget = 24 * 1024 * 1024                    # conservative (v5e/v7x safe)
    max_tile = max(8, (vmem_budget // (2 * K * itemsize)) // 8 * 8)
    tile_b = min(tile_b, max_tile)
    if B <= tile_b:
        tile_b = B                                    # single full-size block (always legal)
    else:
        tile_b = max(8, (tile_b // 8) * 8)            # sublane multiple for partial tiles
    num_tiles = pl.cdiv(B, tile_b)

    targets2d = targets.astype(jnp.int32).reshape(B, 1)

    kernel = functools.partial(
        _ce_label_smooth_kernel,
        epsilon=float(epsilon), num_classes=int(num_classes), batch=int(B),
    )

    # Scoped VMEM: double-buffered logits + targets + per-row output + margin.
    vmem_needed = 2 * (tile_b * K * itemsize + 2 * tile_b * 4) + (2 << 20)
    vmem_limit = min(max(vmem_needed, 16 * 1024 * 1024), 48 * 1024 * 1024)

    in_bytes = B * K * itemsize + B * 4
    cost = pl.CostEstimate(
        flops=6 * B * K,               # sub/cmp/select/mul/add per element (approx)
        transcendentals=B * K,         # exp per element (+ B logs)
        bytes_accessed=in_bytes + num_tiles * tile_b * 4,
    )

    per_row = pl.pallas_call(
        kernel,
        out_shape=jax.ShapeDtypeStruct((num_tiles * tile_b, 1), jnp.float32),
        grid=(num_tiles,),
        in_specs=[
            pl.BlockSpec((tile_b, K), lambda i: (i, 0)),   # logits tile
            pl.BlockSpec((tile_b, 1), lambda i: (i, 0)),   # targets tile
        ],
        out_specs=pl.BlockSpec((tile_b, 1), lambda i: (i, 0)),
        compiler_params=pltpu.CompilerParams(
            dimension_semantics=("parallel",),             # disjoint tiles -> megacore
            vmem_limit_bytes=int(vmem_limit),
        ),
        cost_estimate=cost,
    )(logits, targets2d)

    # Padded rows were zeroed in-kernel; normalize by the true batch size.
    return jnp.sum(per_row) / B


def _reference(logits, targets, num_classes, epsilon=0.1):
    lp = jax.nn.log_softmax(logits.astype(jnp.float32), axis=1)
    oh = jax.nn.one_hot(targets, num_classes, dtype=jnp.float32)
    sm = (1.0 - epsilon) * oh + epsilon / num_classes
    return jnp.sum(jnp.mean(-sm * lp, axis=0))


if __name__ == "__main__":
    epsilon = 0.1
    key = jax.random.PRNGKey(0)
    keys = jax.random.split(key, 3)

    def run_case(batch, num_classes, tile_b, k):
        k1, k2 = jax.random.split(k)
        logits = jax.random.normal(k1, (batch, num_classes), dtype=jnp.float32)
        targets = jax.random.randint(k2, (batch,), 0, num_classes, dtype=jnp.int32)
        loss = cross_entropy_label_smooth(
            logits, targets, num_classes=num_classes, epsilon=epsilon, tile_b=tile_b
        )
        loss = jax.block_until_ready(loss)
        ref = _reference(logits, targets, num_classes, epsilon)
        assert jnp.allclose(loss, ref, atol=1e-5, rtol=1e-4), (batch, num_classes, loss, ref)

    run_case(16, 64, 8, keys[0])    # multi-tile grid, evenly divisible batch
    run_case(10, 48, 8, keys[1])    # partial last tile -> row-mask path
    run_case(2, 16, 256, keys[2])   # tiny batch, single full-array block
    print("KERNEL_OK")
</pallas_src>

<mosaic_0001>
module attributes {stable_mosaic.version = 11 : i64} {
  func.func @_ce_label_smooth_kernel(%arg0: i32, %arg1: memref<8x64xf32, #tpu.memory_space<vmem>>, %arg2: memref<8x1xi32, #tpu.memory_space<vmem>>, %arg3: memref<8x1xf32, #tpu.memory_space<vmem>>) attributes {dimension_semantics = [#tpu.dimension_semantics<parallel>], iteration_bounds = array<i64: 2>, scalar_prefetch = 0 : i64, scratch_operands = 0 : i64, tpu.core_type = #tpu.core_type<tc>, window_params = [{transform_indices = @transform_0, window_bounds = array<i64: 8, 64>}, {transform_indices = @transform_1, window_bounds = array<i64: 8, 1>}, {transform_indices = @transform_2, window_bounds = array<i64: 8, 1>}]} {
    %c0 = arith.constant 0 : index
    %c0_0 = arith.constant 0 : index
    %0 = vector.load %arg1[%c0, %c0_0] : memref<8x64xf32, #tpu.memory_space<vmem>>, vector<8x64xf32>
    %c0_1 = arith.constant 0 : index
    %c0_2 = arith.constant 0 : index
    %1 = vector.load %arg2[%c0_1, %c0_2] : memref<8x1xi32, #tpu.memory_space<vmem>>, vector<8x1xi32>
    %cst = arith.constant dense<0xFF800000> : vector<8xf32>
    %2 = vector.multi_reduction <maximumf>, %0, %cst [1] : vector<8x64xf32> to vector<8xf32>
    %3 = vector.shape_cast %2 : vector<8xf32> to vector<8x1xf32>
    %4 = vector.broadcast %3 : vector<8x1xf32> to vector<8x64xf32>
    %5 = arith.subf %0, %4 : vector<8x64xf32>
    %6 = math.exp %5 : vector<8x64xf32>
    %cst_3 = arith.constant dense<0.000000e+00> : vector<8xf32>
    %7 = vector.multi_reduction <add>, %6, %cst_3 [1] : vector<8x64xf32> to vector<8xf32>
    %8 = vector.shape_cast %7 : vector<8xf32> to vector<8x1xf32>
    %9 = math.log %8 : vector<8x1xf32>
    %10 = tpu.iota {dimensions = array<i32: 1>} : vector<8x64xi32>
    %11 = vector.broadcast %1 : vector<8x1xi32> to vector<8x64xi32>
    %12 = arith.cmpi eq, %10, %11 : vector<8x64xi32>
    %cst_4 = arith.constant 0.000000e+00 : f32
    %13 = vector.broadcast %cst_4 : f32 to vector<8x64xf32>
    %14 = arith.select %12, %5, %13 : vector<8x64xi1>, vector<8x64xf32>
    %cst_5 = arith.constant dense<0.000000e+00> : vector<8xf32>
    %15 = vector.multi_reduction <add>, %14, %cst_5 [1] : vector<8x64xf32> to vector<8xf32>
    %16 = vector.shape_cast %15 : vector<8xf32> to vector<8x1xf32>
    %cst_6 = arith.constant dense<0.000000e+00> : vector<8xf32>
    %17 = vector.multi_reduction <add>, %5, %cst_6 [1] : vector<8x64xf32> to vector<8xf32>
    %18 = vector.shape_cast %17 : vector<8xf32> to vector<8x1xf32>
    %cst_7 = arith.constant 0.899999976 : f32
    %19 = vector.broadcast %cst_7 : f32 to vector<8x1xf32>
    %20 = arith.mulf %19, %16 : vector<8x1xf32>
    %21 = arith.subf %9, %20 : vector<8x1xf32>
    %cst_8 = arith.constant 1.562500e-03 : f32
    %22 = vector.broadcast %cst_8 : f32 to vector<8x1xf32>
    %23 = arith.mulf %22, %18 : vector<8x1xf32>
    %24 = arith.subf %21, %23 : vector<8x1xf32>
    %25 = tpu.iota {dimensions = array<i32: 0>} : vector<8x1xi32>
    %c8_i32 = arith.constant 8 : i32
    %26 = arith.muli %arg0, %c8_i32 : i32
    %27 = vector.broadcast %26 : i32 to vector<8x1xi32>
    %28 = arith.addi %25, %27 : vector<8x1xi32>
    %c16_i32 = arith.constant 16 : i32
    %29 = vector.broadcast %c16_i32 : i32 to vector<8x1xi32>
    %30 = arith.cmpi slt, %28, %29 : vector<8x1xi32>
    %cst_9 = arith.constant 0.000000e+00 : f32
    %31 = vector.broadcast %cst_9 : f32 to vector<8x1xf32>
    %32 = arith.select %30, %24, %31 : vector<8x1xi1>, vector<8x1xf32>
    %c0_10 = arith.constant 0 : index
    %c0_11 = arith.constant 0 : index
    %33 = vector.load %arg3[%c0_10, %c0_11] : memref<8x1xf32, #tpu.memory_space<vmem>>, vector<8x1xf32>
    tpu.vector_store %arg3[%c0_10, %c0_11], %32 {strides = array<i32>} : memref<8x1xf32, #tpu.memory_space<vmem>>, vector<8x1xf32>,
    return
  }
  func.func @transform_0(%arg0: i32) -> (i32, i32) {
    %c0_i32 = arith.constant 0 : i32
    %c0_i32_0 = arith.constant 0 : i32
    return %arg0, %c0_i32 : i32, i32
  }
  func.func @transform_1(%arg0: i32) -> (i32, i32) {
    %c0_i32 = arith.constant 0 : i32
    %c0_i32_0 = arith.constant 0 : i32
    return %arg0, %c0_i32 : i32, i32
  }
  func.func @transform_2(%arg0: i32) -> (i32, i32) {
    %c0_i32 = arith.constant 0 : i32
    %c0_i32_0 = arith.constant 0 : i32
    return %arg0, %c0_i32 : i32, i32
  }
}

</mosaic_0001>

<llo_original>
// kernel: tpu_custom_call.1
$region0: #{tpu_custom_call.1}
  #allocation0 [shape = 'u32[]', space=smem, size = 0x4, offset = 0x4, fixed_abs, tag = 'smem constant byte address 0x4 - core index']
  #allocation1 [shape = 'u32[144,128]{1,0:T(1,128)}', space=vmem, size = 0x12000, scoped, tag = 'internal scratch']
  %s0 = inlined_call_operand.vmem [shape: f32[16,64], index: 0, kind: input, shape index: {}]
  %s1 = inlined_call_operand.vmem [shape: s32[16,1], index: 1, kind: input, shape index: {}]
  %s2 = inlined_call_operand.vmem [shape: f32[16,1], index: 2, kind: output, shape index: {}]
  %s3 = sld [smem:[#allocation0]]
  $region41: #{tpu_custom_call.1} parent=0
    _
  %s5 = ssub.s32 1, %s3
  %s6 = scalar_select 0, %s5, %s3
  loop: start=0, step=1, limit=4
  $region2: #{tpu_custom_call.1} parent=0 // loop_pre_header
    _
  $region3: #{tpu_custom_call.1} parent=0 // loop_header
    %s8 = sphi 0, %s12
    %p9 = scmp.ge.s32.totalorder %s8, 4
    %s18 = sphi 0, %s20
    %s21 = sphi 0, %s18
    %s22 = sphi 0, %s21
    %s38 = sphi 0, %s22
    %s44 = sphi 0, %s46
    %s47 = sphi 0, %s44
    %s48 = sphi 0, %s47
    %s64 = sphi 0, %s48
    %s70 = sphi 0, %s72
    %s73 = sphi 0, %s70
    %s74 = sphi 0, %s73
    %s90 = sphi 0, %s74
  $region4: #{tpu_custom_call.1} parent=0 // loop_header_branch
    %11 = sbr.rel (%p9) target = $region8
  $region5: #{tpu_custom_call.1} parent=0 // loop_body
    %s13 = ssub.s32 %s8, 1
    %s14 = ssub.s32 %s8, 2
    %s15 = sadd.s32 %s8, 1
    %s16 = ssub.s32 %s8, %s15
    %p17 = scmp.eq.s32.totalorder %s16, 0
    %s19 = sadd.s32 %s18, 1
    %s20 = scalar_select %p17, %s18, %s19
    %p23 = pneg %p17
    %p24 = scmp.eq.s32.totalorder %s8, 1
    %p25 = por %p23, %p24
    %p26 = scmp.ne.s32.totalorder %s18, %s21
    %p27 = scmp.eq.s32.totalorder %s8, 0
    %p28 = por %p26, %p27
    %p29 = scmp.ne.s32.totalorder %s18, %s21
    %p30 = scmp.eq.s32.totalorder %s13, 1
    %p31 = por %p29, %p30
    %p32 = scmp.ne.s32.totalorder %s21, %s22
    %p33 = scmp.eq.s32.totalorder %s13, 0
    %p34 = por %p32, %p33
    %p35 = scmp.ne.s32.totalorder %s21, %s22
    %p36 = scmp.eq.s32.totalorder %s14, 1
    %p37 = por %p35, %p36
    %p39 = scmp.ne.s32.totalorder %s22, %s38
    %p40 = scmp.eq.s32.totalorder %s14, 0
    %p41 = por %p39, %p40
    %s42 = ssub.s32 %s8, %s15
    %p43 = scmp.eq.s32.totalorder %s42, 0
    %s45 = sadd.s32 %s44, 1
    %s46 = scalar_select %p43, %s44, %s45
    %p49 = pneg %p43
    %p50 = scmp.eq.s32.totalorder %s8, 1
    %p51 = por %p49, %p50
    %p52 = scmp.ne.s32.totalorder %s44, %s47
    %p53 = scmp.eq.s32.totalorder %s8, 0
    %p54 = por %p52, %p53
    %p55 = scmp.ne.s32.totalorder %s44, %s47
    %p56 = scmp.eq.s32.totalorder %s13, 1
    %p57 = por %p55, %p56
    %p58 = scmp.ne.s32.totalorder %s47, %s48
    %p59 = scmp.eq.s32.totalorder %s13, 0
    %p60 = por %p58, %p59
    %p61 = scmp.ne.s32.totalorder %s47, %s48
    %p62 = scmp.eq.s32.totalorder %s14, 1
    %p63 = por %p61, %p62
    %p65 = scmp.ne.s32.totalorder %s48, %s64
    %p66 = scmp.eq.s32.totalorder %s14, 0
    %p67 = por %p65, %p66
    %s68 = ssub.s32 %s8, %s15
    %p69 = scmp.eq.s32.totalorder %s68, 0
    %s71 = sadd.s32 %s70, 1
    %s72 = scalar_select %p69, %s70, %s71
    %p75 = pneg %p69
    %p76 = scmp.eq.s32.totalorder %s8, 1
    %p77 = por %p75, %p76
    %p78 = scmp.ne.s32.totalorder %s70, %s73
    %p79 = scmp.eq.s32.totalorder %s8, 0
    %p80 = por %p78, %p79
    %p81 = scmp.ne.s32.totalorder %s70, %s73
    %p82 = scmp.eq.s32.totalorder %s13, 1
    %p83 = por %p81, %p82
    %p84 = scmp.ne.s32.totalorder %s73, %s74
    %p85 = scmp.eq.s32.totalorder %s13, 0
    %p86 = por %p84, %p85
    %p87 = scmp.ne.s32.totalorder %s73, %s74
    %p88 = scmp.eq.s32.totalorder %s14, 1
    %p89 = por %p87, %p88
    %p91 = scmp.ne.s32.totalorder %s74, %s90
    %p92 = scmp.eq.s32.totalorder %s14, 0
    %p93 = por %p91, %p92
    %p94 = scmp.le.s32.totalorder 1, %s8
    %p95 = scmp.lt.s32.totalorder %s8, 3
    %p96 = pnand %p94, %p95
    %p97 = pneg %p96
    // Predicated region
    $region9: #{tpu_custom_call.1} parent=5 // pred_check
      _
    $region10: #{tpu_custom_call.1} parent=5 // pred_check_branch
      %99 = sbr.rel (%p96) target = $region12
    $region11: #{tpu_custom_call.1} parent=5 // pred_region
      %s100 = ssub.s32 %s8, 1
    $region12: #{tpu_custom_call.1} parent=5 // pred_fallthru
      _
    %p101 = scmp.lt.s32.totalorder %s8, 2
    // Predicated region
    $region13: #{tpu_custom_call.1} parent=5 // pred_check
      %p102 = pneg %p101
    $region14: #{tpu_custom_call.1} parent=5 // pred_check_branch
      %104 = sbr.rel (%p102) target = $region16
    $region15: #{tpu_custom_call.1} parent=5 // pred_region
      // Predicated region
      $region17: #{tpu_custom_call.1} parent=15 // pred_check
        %p105 = pneg %p28
      $region18: #{tpu_custom_call.1} parent=15 // pred_check_branch
        %107 = sbr.rel (%p105) target = $region20
      $region19: #{tpu_custom_call.1} parent=15 // pred_region
        %p108 = scmp.lt.s32.totalorder %s8, 1
        %s109 = scalar_select %p108, %s8, 1
        %s110 = smul.addr %s109, 8
        %s111 = scalar_lea.vmem %s0, %s110
      $region20: #{tpu_custom_call.1} parent=15 // pred_fallthru
        _
      // Predicated region
      $region21: #{tpu_custom_call.1} parent=15 // pred_check
        %p112 = pneg %p54
      $region22: #{tpu_custom_call.1} parent=15 // pred_check_branch
        %114 = sbr.rel (%p112) target = $region24
      $region23: #{tpu_custom_call.1} parent=15 // pred_region
        %p115 = scmp.lt.s32.totalorder %s8, 1
        %s116 = scalar_select %p115, %s8, 1
        %s117 = smul.addr %s116, 8
        %s118 = scalar_lea.vmem %s1, %s117
      $region24: #{tpu_custom_call.1} parent=15 // pred_fallthru
        _
    $region16: #{tpu_custom_call.1} parent=5 // pred_fallthru
      _
    %p119 = scmp.le.s32.totalorder 1, %s8
    %p120 = scmp.lt.s32.totalorder %s8, 3
    %p121 = pnand %p119, %p120
    %p122 = pneg %p121
    // Predicated region
    $region25: #{tpu_custom_call.1} parent=5 // pred_check
      _
    $region26: #{tpu_custom_call.1} parent=5 // pred_check_branch
      %124 = sbr.rel (%p121) target = $region28
    $region27: #{tpu_custom_call.1} parent=5 // pred_region
      %s125 = ssub.s32 %s8, 1
      %p126 = scmp.lt.s32.totalorder %s13, 1
      %s127 = scalar_select %p126, %s13, 1
      %s128 = smul.addr %s127, 8
      %s129 = scalar_lea.vmem %s0, %s128
      %p130 = pneg %p34
      %p131 = pneg %p31
      %p132 = scmp.lt.s32.totalorder %s13, 1
      %s133 = scalar_select %p132, %s13, 1
      %s134 = smul.addr %s133, 8
      %s135 = scalar_lea.vmem %s1, %s134
      %p136 = pneg %p60
      %p137 = pneg %p57
      %p138 = pneg %p86
      %p139 = pneg %p83
      %p140 = scmp.lt.s32.totalorder %s13, 1
      %s141 = scalar_select %p140, %s13, 1
      %s142 = smul.addr %s141, 8
      %s143 = scalar_lea.vmem %s2, %s142
      %p144 = scmp.lt.s32.totalorder %s13, 1
      %s145 = scalar_select %p144, %s13, 1
      %s146 = smul.addr %s145, 8
      %s147 = scalar_lea.vmem %s0, %s146
      %p148 = scmp.lt.s32.totalorder %s13, 1
      %s149 = scalar_select %p148, %s13, 1
      %s150 = smul.addr %s149, 8
      %s151 = scalar_lea.vmem %s1, %s150
      %p152 = scmp.lt.s32.totalorder %s13, 1
      %s153 = scalar_select %p152, %s13, 1
      %s154 = smul.addr %s153, 8
      %s155 = scalar_lea.vmem %s2, %s154
      %v156 = vld [vmem:[%s147] sm:$0xff]
      %v157 = vld [vmem:[%s151] sm:$0xff]
      %vm158 = vcmask 523264
      %v159 = vsel %vm158, %v156, -inf
      %160 = vmax.xlane.f32.xlu0 %v159
      %v161 = vpop.xlane.xlu0 %160
      %v162 = vsub.f32 %v156, %v161
      %v163 = vmul.f32 %v162, 1.442695
      %v164 = vpow.pop %v163
      %v165 = vsel %vm158, %v164, 0.0
      %166 = vadd.xlane.f32.xlu0 %v165
      %v167 = vpop.xlane.xlu0 %166
      %v168 = vlog2.pop %v167
      %v169 = vmul.f32 %v168, 0.6931472
      %v170 = vlaneseq
      %v171 = vand.u32 %v170, 127
      %172 = vset.pattern.permute.xlu0 0
      %173 = vperm.xlu0 %172, %v157
      %v174 = vpop.permute.xlu0 %173
      %vm175 = vcmp.eq.s32.totalorder %v171, %v174
      %v176 = vsel %vm175, %v162, 0.0
      %v177 = vsel %vm158, %v176, 0.0
      %178 = vadd.xlane.f32.xlu0 %v177
      %v179 = vpop.xlane.xlu0 %178
      %v180 = vsel %vm158, %v162, 0.0
      %181 = vadd.xlane.f32.xlu0 %v180
      %v182 = vpop.xlane.xlu0 %181
      %v183 = vmul.f32 %v179, 0.9
      %v184 = vsub.f32 %v169, %v183
      %v185 = vmul.f32 %v182, 0.0015625
      %v186 = vsub.f32 %v184, %v185
      %v187 = vlaneseq
      %v188 = vshrl.u32 %v187, 7
      %s189 = smul.u32 %s13, 8
      %v190 = vstv %s189
      %v191 = vadd.s32 %v188, %v190
      %vm192 = vcmp.lt.s32.totalorder %v191, 16
      %v193 = vsel %vm192, %v186, 0.0
      %vm194 = vcmask 7168
      %195 = vst.msk [vmem:[%s155] sm:$0xff] %vm194, %v193
      %p196 = scmp.lt.s32.totalorder %s13, 1
      %s197 = scalar_select %p196, %s13, 1
      %s198 = smul.addr %s197, 8
      %s199 = scalar_lea.vmem %s2, %s198
      // Predicated region
      $region29: #{tpu_custom_call.1} parent=27 // pred_check
        %p200 = pneg %p83
      $region30: #{tpu_custom_call.1} parent=27 // pred_check_branch
        %202 = sbr.rel (%p200) target = $region32
      $region31: #{tpu_custom_call.1} parent=27 // pred_region
        _
      $region32: #{tpu_custom_call.1} parent=27 // pred_fallthru
        _
    $region28: #{tpu_custom_call.1} parent=5 // pred_fallthru
      _
    %p203 = scmp.le.s32.totalorder 2, %s8
    // Predicated region
    $region33: #{tpu_custom_call.1} parent=5 // pred_check
      %p204 = pneg %p203
    $region34: #{tpu_custom_call.1} parent=5 // pred_check_branch
      %206 = sbr.rel (%p204) target = $region36
    $region35: #{tpu_custom_call.1} parent=5 // pred_region
      %s207 = ssub.s32 %s8, 2
      // Predicated region
      $region37: #{tpu_custom_call.1} parent=35 // pred_check
        %p208 = pneg %p89
      $region38: #{tpu_custom_call.1} parent=35 // pred_check_branch
        %210 = sbr.rel (%p208) target = $region40
      $region39: #{tpu_custom_call.1} parent=35 // pred_region
        %p211 = scmp.lt.s32.totalorder %s14, 1
        %s212 = scalar_select %p211, %s14, 1
        %s213 = smul.addr %s212, 8
        %s214 = scalar_lea.vmem %s2, %s213
      $region40: #{tpu_custom_call.1} parent=35 // pred_fallthru
        _
    $region36: #{tpu_custom_call.1} parent=5 // pred_fallthru
      _
  $region6: #{tpu_custom_call.1} parent=0 // loop_footer
    %s12 = sadd.s32 1, %s8
  $region7: #{tpu_custom_call.1} parent=0 // loop_footer_branch
    %7 = sbr.rel target = $region3
  $region8: #{tpu_custom_call.1} parent=0 // loop_exit
    _

</llo_original>
